<compile_context>
chip_gen: v5e
topology: v5e:2x2
jax: 0.10.0
libtpu: 0.0.40
codegen_flags: <defaults>
</compile_context>

<pallas_src>
import functools
import numpy as np
import jax
import jax.numpy as jnp
from jax.experimental import pallas as pl
from jax.experimental.pallas import tpu as pltpu

LOG_SCALE_FACTOR = 3.0   # ActNorm.log_scale_factor in the reference module


def _round_up(x, m):
    return (x + m - 1) // m * m


def _pick_tile(l_total, cap=8192):
    """Lane-dense tile: multiple of 128, capped.  Prefer >=2 grid steps (v7x
    megacore) when the workload is big enough that each half stays lane-dense."""
    t = min(cap, _round_up(max(l_total, 1), 128))
    if 2048 <= l_total <= cap:
        t = _round_up((l_total + 1) // 2, 128)
    return max(t, 128)


def _conv_actnorm_kernel(xmain_ref, xhalo_ref, w_ref, bias_ref, out_ref,
                         win_ref, xcol_ref, *, shifts, tile, cin):
    """One lane super-tile: in-kernel im2col (halo window) + folded GEMM + bias."""
    # Assemble the halo'd window [ current tile | halo strip ] in VMEM scratch.
    win_ref[:, :tile] = xmain_ref[...]
    win_ref[:, tile:] = xhalo_ref[0]
    # Folded im2col block: row (tap*Cin + c) = channel c shifted by dy*Wp + dx.
    # Static slices only (loads with lane shift + masked sublane stores).
    for t, d in enumerate(shifts):
        xcol_ref[t * cin:(t + 1) * cin, :] = win_ref[:, d:d + tile]
    # One lane-dense MXU GEMM: (Cout, K*K*Cin) @ (K*K*Cin, TILE).
    acc = jax.lax.dot_general(
        w_ref[...], xcol_ref[...],
        dimension_numbers=(((1,), (0,)), ((), ())),
        preferred_element_type=jnp.float32)
    # ActNorm scale is pre-folded into the weights; only the (scaled) bias remains.
    out_ref[...] = (acc + bias_ref[...]).astype(out_ref.dtype)


@functools.partial(jax.jit, static_argnames=("padding",))
def conv2d_actnorm_forward(x, weight, an_bias, an_log_scale, padding=1):
    """Glow Conv2d forward: replicate-pad + KxK conv (no bias) + ActNorm affine.

    x:            (B, Cin, H, W) float32, NCHW (PyTorch layout)
    weight:       (Cout, Cin, K, K) float32 (OIHW)
    an_bias:      (1, Cout, 1, 1) float32
    an_log_scale: (1, Cout, 1, 1) float32
    returns:      (B, Cout, H_out, W_out) float32 (NCHW)
    """
    B, Cin, H, W = x.shape
    Cout, Cin_w, K, K2 = weight.shape
    assert Cin == Cin_w and K == K2
    # The reference module only ever replicate-pads (padding==1) or not at all.
    assert padding in (0, 1), "Glow Conv2d uses padding=1 (replicate) or 0 (none)"

    x = x.astype(jnp.float32)
    if padding == 1:
        x = jnp.pad(x, ((0, 0), (0, 0), (1, 1), (1, 1)), mode="edge")  # replicate
    Hp, Wp = x.shape[2], x.shape[3]
    Ho, Wo = Hp - (K - 1), Wp - (K - 1)

    # Channel-major, batch folded into the lane axis (padded coordinates):
    #   xf[c, b*Hp*Wp + h*Wp + w] = x_padded[b, c, h, w]
    # (XLA fuses transpose+reshape into the pad fusion: ~1.1x write, no 9x im2col.)
    L = B * Hp * Wp
    xf = jnp.transpose(x, (1, 0, 2, 3)).reshape(Cin, L)

    halo = (K - 1) * Wp + (K - 1)             # max tap lane offset
    halo_pad = _round_up(halo, 128)
    tile = _pick_tile(L)
    nt = pl.cdiv(L, tile)
    total = nt * tile + halo_pad
    xf = jnp.pad(xf, ((0, 0), (0, total - L)))   # zero tail only feeds junk lanes

    # Thin halo strips (tiny) so each grid step sees a (tile + halo) window while
    # the main stream is read exactly once through disjoint, auto-pipelined blocks.
    xhalo = jnp.stack(
        [xf[:, (s + 1) * tile:(s + 1) * tile + halo_pad] for s in range(nt)], axis=0)

    # Fold ActNorm into the GEMM:  (conv + b)*exp(3*ls) == (w*scale) (*) x + b*scale
    kkc = K * K * Cin
    scale = jnp.exp(an_log_scale.reshape(Cout).astype(jnp.float32) * LOG_SCALE_FACTOR)
    w2 = (jnp.transpose(weight, (0, 2, 3, 1)).reshape(Cout, kkc).astype(jnp.float32)
          * scale[:, None])
    bias2 = (an_bias.reshape(Cout).astype(jnp.float32) * scale).reshape(Cout, 1)

    shifts = tuple(dy * Wp + dx for dy in range(K) for dx in range(K))

    # Footprint-based VMEM request, capped well under v7x's 64 MiB per-TC budget.
    vmem_limit = min(48 * 1024 * 1024,
                     max(16 * 1024 * 1024, 8 * 4 * tile * (Cin + Cout + kkc)))

    out_flat = pl.pallas_call(
        functools.partial(_conv_actnorm_kernel, shifts=shifts, tile=tile, cin=Cin),
        grid=(nt,),
        in_specs=[
            pl.BlockSpec((Cin, tile), lambda s: (0, s)),            # main lane tile (1x read)
            pl.BlockSpec((1, Cin, halo_pad), lambda s: (s, 0, 0)),  # tiny halo strip
            pl.BlockSpec((Cout, kkc), lambda s: (0, 0)),            # folded, ActNorm-scaled W
            pl.BlockSpec((Cout, 1), lambda s: (0, 0)),              # folded ActNorm bias
        ],
        out_specs=pl.BlockSpec((Cout, tile), lambda s: (0, s)),     # lane-dense output
        out_shape=jax.ShapeDtypeStruct((Cout, nt * tile), jnp.float32),
        scratch_shapes=[
            pltpu.VMEM((Cin, tile + halo_pad), jnp.float32),        # halo'd window
            pltpu.VMEM((kkc, tile), jnp.float32),                   # folded im2col block
        ],
        compiler_params=pltpu.CompilerParams(
            dimension_semantics=("parallel",),
            vmem_limit_bytes=vmem_limit,
        ),
    )(xf, xhalo, w2, bias2)

    # Compact padded-coordinate lanes back to NCHW (layout plumbing only).
    out = out_flat[:, :L].reshape(Cout, B, Hp, Wp)[:, :, :Ho, :Wo]
    return jnp.transpose(out, (1, 0, 2, 3))


if __name__ == "__main__":
    key = jax.random.PRNGKey(0)
    B, Cin, H, W = 2, 4, 16, 16
    Cout, K = 8, 3
    kx, kw, kb, ks = jax.random.split(key, 4)

    x = jax.random.normal(kx, (B, Cin, H, W), jnp.float32)
    # Conv2d init: weight ~ N(0, 0.05); ActNorm params are zero at init — use
    # small nonzero values here so the affine path is exercised nontrivially.
    weight = 0.05 * jax.random.normal(kw, (Cout, Cin, K, K), jnp.float32)
    an_bias = 0.1 * jax.random.normal(kb, (1, Cout, 1, 1), jnp.float32)
    an_log_scale = 0.1 * jax.random.normal(ks, (1, Cout, 1, 1), jnp.float32)

    y = jax.block_until_ready(conv2d_actnorm_forward(x, weight, an_bias, an_log_scale))

    # Pure-JAX reference: replicate pad + VALID conv + ActNorm affine.
    xp = jnp.pad(x, ((0, 0), (0, 0), (1, 1), (1, 1)), mode="edge")
    ref = jax.lax.conv_general_dilated(
        xp, weight, window_strides=(1, 1), padding="VALID",
        dimension_numbers=("NCHW", "OIHW", "NCHW"),
        precision=jax.lax.Precision.HIGHEST)
    ref = (ref + an_bias) * jnp.exp(an_log_scale * LOG_SCALE_FACTOR)

    assert y.shape == (B, Cout, H, W)
    np.testing.assert_allclose(np.asarray(y), np.asarray(ref), rtol=2e-4, atol=2e-4)
    print("KERNEL_OK")
</pallas_src>

<mosaic_0001>
module attributes {stable_mosaic.version = 11 : i64} {
  func.func @_conv_actnorm_kernel(%arg0: i32, %arg1: memref<4x768xf32, #tpu.memory_space<vmem>>, %arg2: memref<1x4x128xf32, #tpu.memory_space<vmem>>, %arg3: memref<8x36xf32, #tpu.memory_space<vmem>>, %arg4: memref<8x1xf32, #tpu.memory_space<vmem>>, %arg5: memref<8x768xf32, #tpu.memory_space<vmem>>, %arg6: memref<4x896xf32, #tpu.memory_space<vmem>>, %arg7: memref<36x768xf32, #tpu.memory_space<vmem>>) attributes {dimension_semantics = [#tpu.dimension_semantics<parallel>], iteration_bounds = array<i64: 1>, scalar_prefetch = 0 : i64, scratch_operands = 2 : i64, tpu.core_type = #tpu.core_type<tc>, window_params = [{transform_indices = @transform_0, window_bounds = array<i64: 4, 768>}, {transform_indices = @transform_1, window_bounds = array<i64: 1, 4, 128>}, {pipeline_mode = #tpu.pipeline_mode<synchronous>, transform_indices = @transform_2, window_bounds = array<i64: 8, 36>}, {pipeline_mode = #tpu.pipeline_mode<synchronous>, transform_indices = @transform_3, window_bounds = array<i64: 8, 1>}, {transform_indices = @transform_4, window_bounds = array<i64: 8, 768>}]} {
    %c0 = arith.constant 0 : index
    %c0_0 = arith.constant 0 : index
    %0 = vector.load %arg1[%c0, %c0_0] : memref<4x768xf32, #tpu.memory_space<vmem>>, vector<4x768xf32>
    %c0_1 = arith.constant 0 : index
    %c0_2 = arith.constant 0 : index
    %1 = vector.load %arg6[%c0_1, %c0_2] : memref<4x896xf32, #tpu.memory_space<vmem>>, vector<4x768xf32>
    tpu.vector_store %arg6[%c0_1, %c0_2], %0 {strides = array<i32>} : memref<4x896xf32, #tpu.memory_space<vmem>>, vector<4x768xf32>,
    %c0_3 = arith.constant 0 : index
    %c0_4 = arith.constant 0 : index
    %c0_5 = arith.constant 0 : index
    %2 = vector.load %arg2[%c0_3, %c0_4, %c0_5] : memref<1x4x128xf32, #tpu.memory_space<vmem>>, vector<1x4x128xf32>
    %3 = vector.shape_cast %2 : vector<1x4x128xf32> to vector<4x128xf32>
    %c0_6 = arith.constant 0 : index
    %c768 = arith.constant 768 : index
    %4 = vector.load %arg6[%c0_6, %c768] : memref<4x896xf32, #tpu.memory_space<vmem>>, vector<4x128xf32>
    tpu.vector_store %arg6[%c0_6, %c768], %3 {strides = array<i32>} : memref<4x896xf32, #tpu.memory_space<vmem>>, vector<4x128xf32>,
    %c0_7 = arith.constant 0 : index
    %c0_8 = arith.constant 0 : index
    %5 = vector.load %arg6[%c0_7, %c0_8] : memref<4x896xf32, #tpu.memory_space<vmem>>, vector<4x768xf32>
    %c0_9 = arith.constant 0 : index
    %c0_10 = arith.constant 0 : index
    %6 = vector.load %arg7[%c0_9, %c0_10] : memref<36x768xf32, #tpu.memory_space<vmem>>, vector<4x768xf32>
    tpu.vector_store %arg7[%c0_9, %c0_10], %5 {strides = array<i32>} : memref<36x768xf32, #tpu.memory_space<vmem>>, vector<4x768xf32>,
    %c0_11 = arith.constant 0 : index
    %c1 = arith.constant 1 : index
    %7 = vector.load %arg6[%c0_11, %c1] : memref<4x896xf32, #tpu.memory_space<vmem>>, vector<4x768xf32>
    %c4 = arith.constant 4 : index
    %c0_12 = arith.constant 0 : index
    %8 = vector.load %arg7[%c4, %c0_12] : memref<36x768xf32, #tpu.memory_space<vmem>>, vector<4x768xf32>
    tpu.vector_store %arg7[%c4, %c0_12], %7 {strides = array<i32>} : memref<36x768xf32, #tpu.memory_space<vmem>>, vector<4x768xf32>,
    %c0_13 = arith.constant 0 : index
    %c2 = arith.constant 2 : index
    %9 = vector.load %arg6[%c0_13, %c2] : memref<4x896xf32, #tpu.memory_space<vmem>>, vector<4x768xf32>
    %c8 = arith.constant 8 : index
    %c0_14 = arith.constant 0 : index
    %10 = vector.load %arg7[%c8, %c0_14] : memref<36x768xf32, #tpu.memory_space<vmem>>, vector<4x768xf32>
    tpu.vector_store %arg7[%c8, %c0_14], %9 {strides = array<i32>} : memref<36x768xf32, #tpu.memory_space<vmem>>, vector<4x768xf32>,
    %c0_15 = arith.constant 0 : index
    %c18 = arith.constant 18 : index
    %11 = vector.load %arg6[%c0_15, %c18] : memref<4x896xf32, #tpu.memory_space<vmem>>, vector<4x768xf32>
    %c12 = arith.constant 12 : index
    %c0_16 = arith.constant 0 : index
    %12 = vector.load %arg7[%c12, %c0_16] : memref<36x768xf32, #tpu.memory_space<vmem>>, vector<4x768xf32>
    tpu.vector_store %arg7[%c12, %c0_16], %11 {strides = array<i32>} : memref<36x768xf32, #tpu.memory_space<vmem>>, vector<4x768xf32>,
    %c0_17 = arith.constant 0 : index
    %c19 = arith.constant 19 : index
    %13 = vector.load %arg6[%c0_17, %c19] : memref<4x896xf32, #tpu.memory_space<vmem>>, vector<4x768xf32>
    %c16 = arith.constant 16 : index
    %c0_18 = arith.constant 0 : index
    %14 = vector.load %arg7[%c16, %c0_18] : memref<36x768xf32, #tpu.memory_space<vmem>>, vector<4x768xf32>
    tpu.vector_store %arg7[%c16, %c0_18], %13 {strides = array<i32>} : memref<36x768xf32, #tpu.memory_space<vmem>>, vector<4x768xf32>,
    %c0_19 = arith.constant 0 : index
    %c20 = arith.constant 20 : index
    %15 = vector.load %arg6[%c0_19, %c20] : memref<4x896xf32, #tpu.memory_space<vmem>>, vector<4x768xf32>
    %c20_20 = arith.constant 20 : index
    %c0_21 = arith.constant 0 : index
    %16 = vector.load %arg7[%c20_20, %c0_21] : memref<36x768xf32, #tpu.memory_space<vmem>>, vector<4x768xf32>
    tpu.vector_store %arg7[%c20_20, %c0_21], %15 {strides = array<i32>} : memref<36x768xf32, #tpu.memory_space<vmem>>, vector<4x768xf32>,
    %c0_22 = arith.constant 0 : index
    %c36 = arith.constant 36 : index
    %17 = vector.load %arg6[%c0_22, %c36] : memref<4x896xf32, #tpu.memory_space<vmem>>, vector<4x768xf32>
    %c24 = arith.constant 24 : index
    %c0_23 = arith.constant 0 : index
    %18 = vector.load %arg7[%c24, %c0_23] : memref<36x768xf32, #tpu.memory_space<vmem>>, vector<4x768xf32>
    tpu.vector_store %arg7[%c24, %c0_23], %17 {strides = array<i32>} : memref<36x768xf32, #tpu.memory_space<vmem>>, vector<4x768xf32>,
    %c0_24 = arith.constant 0 : index
    %c37 = arith.constant 37 : index
    %19 = vector.load %arg6[%c0_24, %c37] : memref<4x896xf32, #tpu.memory_space<vmem>>, vector<4x768xf32>
    %c28 = arith.constant 28 : index
    %c0_25 = arith.constant 0 : index
    %20 = vector.load %arg7[%c28, %c0_25] : memref<36x768xf32, #tpu.memory_space<vmem>>, vector<4x768xf32>
    tpu.vector_store %arg7[%c28, %c0_25], %19 {strides = array<i32>} : memref<36x768xf32, #tpu.memory_space<vmem>>, vector<4x768xf32>,
    %c0_26 = arith.constant 0 : index
    %c38 = arith.constant 38 : index
    %21 = vector.load %arg6[%c0_26, %c38] : memref<4x896xf32, #tpu.memory_space<vmem>>, vector<4x768xf32>
    %c32 = arith.constant 32 : index
    %c0_27 = arith.constant 0 : index
    %22 = vector.load %arg7[%c32, %c0_27] : memref<36x768xf32, #tpu.memory_space<vmem>>, vector<4x768xf32>
    tpu.vector_store %arg7[%c32, %c0_27], %21 {strides = array<i32>} : memref<36x768xf32, #tpu.memory_space<vmem>>, vector<4x768xf32>,
    %c0_28 = arith.constant 0 : index
    %c0_29 = arith.constant 0 : index
    %23 = vector.load %arg3[%c0_28, %c0_29] : memref<8x36xf32, #tpu.memory_space<vmem>>, vector<8x36xf32>
    %c0_30 = arith.constant 0 : index
    %c0_31 = arith.constant 0 : index
    %24 = vector.load %arg7[%c0_30, %c0_31] : memref<36x768xf32, #tpu.memory_space<vmem>>, vector<36x768xf32>
    %cst = arith.constant dense<0.000000e+00> : vector<8x768xf32>
    %25 = tpu.matmul %23, %24, %cst {dimension_numbers = #tpu.dot_dimension_numbers<[1], [0], [0], [1], [0, 0, 1, 1], [], []>} : vector<8x36xf32>, vector<36x768xf32>, vector<8x768xf32> -> vector<8x768xf32>
    %c0_32 = arith.constant 0 : index
    %c0_33 = arith.constant 0 : index
    %26 = vector.load %arg4[%c0_32, %c0_33] : memref<8x1xf32, #tpu.memory_space<vmem>>, vector<8x1xf32>
    %27 = vector.broadcast %26 : vector<8x1xf32> to vector<8x768xf32>
    %28 = arith.addf %25, %27 : vector<8x768xf32>
    %c0_34 = arith.constant 0 : index
    %c0_35 = arith.constant 0 : index
    %29 = vector.load %arg5[%c0_34, %c0_35] : memref<8x768xf32, #tpu.memory_space<vmem>>, vector<8x768xf32>
    tpu.vector_store %arg5[%c0_34, %c0_35], %28 {strides = array<i32>} : memref<8x768xf32, #tpu.memory_space<vmem>>, vector<8x768xf32>,
    return
  }
  func.func @transform_0(%arg0: i32) -> (i32, i32) {
    %c0_i32 = arith.constant 0 : i32
    %c0_i32_0 = arith.constant 0 : i32
    return %c0_i32, %arg0 : i32, i32
  }
  func.func @transform_1(%arg0: i32) -> (i32, i32, i32) {
    %c0_i32 = arith.constant 0 : i32
    %c0_i32_0 = arith.constant 0 : i32
    %c0_i32_1 = arith.constant 0 : i32
    return %arg0, %c0_i32, %c0_i32_0 : i32, i32, i32
  }
  func.func @transform_2(%arg0: i32) -> (i32, i32) {
    %c0_i32 = arith.constant 0 : i32
    %c0_i32_0 = arith.constant 0 : i32
    %c0_i32_1 = arith.constant 0 : i32
    return %c0_i32, %c0_i32_0 : i32, i32
  }
  func.func @transform_3(%arg0: i32) -> (i32, i32) {
    %c0_i32 = arith.constant 0 : i32
    %c0_i32_0 = arith.constant 0 : i32
    %c0_i32_1 = arith.constant 0 : i32
    return %c0_i32, %c0_i32_0 : i32, i32
  }
  func.func @transform_4(%arg0: i32) -> (i32, i32) {
    %c0_i32 = arith.constant 0 : i32
    %c0_i32_0 = arith.constant 0 : i32
    return %c0_i32, %arg0 : i32, i32
  }
}

</mosaic_0001>

<llo_original>
// kernel: conv2d_actnorm_forward.1
$region0: #{conv2d_actnorm_forward.1}
  #allocation0 [shape = 'u32[]', space=smem, size = 0x4, offset = 0x4, fixed_abs, tag = 'smem constant byte address 0x4 - core index']
  #allocation1 [shape = 'u32[72,128]{1,0:T(1,128)}', space=vmem, size = 0x9000, scoped, tag = 'internal scratch']
  #allocation2 [shape = 'f32[4,896]{1,0:T(4,128)}', space=vmem, size = 0x3800, scoped, tag = 'scratch operand']
  #allocation3 [shape = 'f32[36,768]{1,0:T(8,128)}', space=vmem, size = 0x1e000, scoped, tag = 'scratch operand']
  %s0 = inlined_call_operand.vmem [shape: f32[4,896], index: 0, kind: input, shape index: {}]
  %s1 = inlined_call_operand.vmem [shape: f32[1,4,128], index: 1, kind: input, shape index: {}]
  %s2 = inlined_call_operand.vmem [shape: f32[8,36], index: 2, kind: input, shape index: {}]
  %s3 = inlined_call_operand.vmem [shape: f32[8,1], index: 3, kind: input, shape index: {}]
  %s4 = inlined_call_operand.vmem [shape: f32[8,768], index: 4, kind: output, shape index: {}]
  %s5 = sld [smem:[#allocation0]]
  $region26: #{conv2d_actnorm_forward.1} parent=0
    _
  %s7 = ssub.s32 1, %s5
  %s8 = scalar_select 0, %s7, %s5
  // Predicated region
  $region2: #{conv2d_actnorm_forward.1} parent=0 // pred_check
    _
  $region3: #{conv2d_actnorm_forward.1} parent=0 // pred_check_branch
    %10 = sbr.rel (0) target = $region5
  $region4: #{conv2d_actnorm_forward.1} parent=0 // pred_region
    _
  $region5: #{conv2d_actnorm_forward.1} parent=0 // pred_fallthru
    _
  // Predicated region
  $region6: #{conv2d_actnorm_forward.1} parent=0 // pred_check
    _
  $region7: #{conv2d_actnorm_forward.1} parent=0 // pred_check_branch
    %12 = sbr.rel (0) target = $region9
  $region8: #{conv2d_actnorm_forward.1} parent=0 // pred_region
    _
  $region9: #{conv2d_actnorm_forward.1} parent=0 // pred_fallthru
    _
  // Predicated region
  $region10: #{conv2d_actnorm_forward.1} parent=0 // pred_check
    _
  $region11: #{conv2d_actnorm_forward.1} parent=0 // pred_check_branch
    %14 = sbr.rel (0) target = $region13
  $region12: #{conv2d_actnorm_forward.1} parent=0 // pred_region
    _
  $region13: #{conv2d_actnorm_forward.1} parent=0 // pred_fallthru
    _
  // Predicated region
  $region14: #{conv2d_actnorm_forward.1} parent=0 // pred_check
    _
  $region15: #{conv2d_actnorm_forward.1} parent=0 // pred_check_branch
    %16 = sbr.rel (0) target = $region17
  $region16: #{conv2d_actnorm_forward.1} parent=0 // pred_region
    _
  $region17: #{conv2d_actnorm_forward.1} parent=0 // pred_fallthru
    _
  %v17 = vld [vmem:[%s0] sm:$0xff]
  %v18 = vld [vmem:[%s0 + $0x8] sm:$0xff]
  %v19 = vld [vmem:[%s0 + $0x10] sm:$0xff]
  %20 = vst [vmem:[#allocation2] sm:$0xff] %v17
  %21 = vst [vmem:[#allocation2 + $0x8] sm:$0xff] %v18
  %22 = vst [vmem:[#allocation2 + $0x10] sm:$0xff] %v19
  %v23 = vld [vmem:[%s1] sm:$0xf]
  %24 = vst [vmem:[#allocation2 + $0x18] sm:$0xf] %v23
  %v25 = vld [vmem:[#allocation2] sm:$0xff]
  %v26 = vld [vmem:[#allocation2 + $0x8] sm:$0xff]
  %v27 = vld [vmem:[#allocation2 + $0x10] sm:$0xff]
  %31 = vst [vmem:[#allocation1] ss:$2 sm:$0xff] %v25
  %s32 = scalar_lea.vmem [#allocation1], 16
  %33 = vst [vmem:[%s32] ss:$2 sm:$0xff] %v26
  %s34 = scalar_lea.vmem [#allocation1], 32
  %35 = vst [vmem:[%s34] ss:$2 sm:$0xff] %v27
  %v36 = vld.sshfl [vmem:[#allocation1] sm:$0xff pattern:$0x75316420]
  %v37 = vld.sshfl [vmem:[#allocation1 + $0x8] sm:$0xff pattern:$0x75316420]
  %v38 = vld.sshfl [vmem:[#allocation1 + $0x10] sm:$0xff pattern:$0x75316420]
  %v39 = vld.sshfl [vmem:[#allocation1 + $0x18] sm:$0xff pattern:$0x75316420]
  %v40 = vld.sshfl [vmem:[#allocation1 + $0x20] sm:$0xff pattern:$0x75316420]
  %v41 = vld.sshfl [vmem:[#allocation1 + $0x28] sm:$0xff pattern:$0x75316420]
  %48 = vst [vmem:[#allocation3] sm:$0xf] %v36
  %49 = vst [vmem:[#allocation3 + $0x8] sm:$0xf] %v37
  %50 = vst [vmem:[#allocation3 + $0x10] sm:$0xf] %v38
  %51 = vst [vmem:[#allocation3 + $0x18] sm:$0xf] %v39
  %52 = vst [vmem:[#allocation3 + $0x20] sm:$0xf] %v40
  %53 = vst [vmem:[#allocation3 + $0x28] sm:$0xf] %v41
  %v54 = vld [vmem:[#allocation2] sm:$0xff]
  %v55 = vld [vmem:[#allocation2 + $0x8] sm:$0xff]
  %v56 = vld [vmem:[#allocation2 + $0x10] sm:$0xff]
  %v57 = vld [vmem:[#allocation2 + $0x18] sm:$0xf]
  %s62 = scalar_lea.vmem [#allocation1], 1
  %63 = vst [vmem:[%s62] ss:$2 sm:$0xff] %v54
  %s64 = scalar_lea.vmem [#allocation1], 17
  %65 = vst [vmem:[%s64] ss:$2 sm:$0xff] %v55
  %s66 = scalar_lea.vmem [#allocation1], 33
  %67 = vst [vmem:[%s66] ss:$2 sm:$0xff] %v56
  %s68 = scalar_lea.vmem [#allocation1], 49
  %69 = vst [vmem:[%s68] ss:$2 sm:$0xff] %v57
  %v70 = vld.sshfl [vmem:[#allocation1] sm:$0xff pattern:$0x75316420]
  %v71 = vld.sshfl [vmem:[#allocation1 + $0x8] sm:$0xff pattern:$0x75316420]
  %v72 = vld.sshfl [vmem:[#allocation1 + $0x10] sm:$0xff pattern:$0x75316420]
  %v73 = vld.sshfl [vmem:[#allocation1 + $0x18] sm:$0xff pattern:$0x75316420]
  %v74 = vld.sshfl [vmem:[#allocation1 + $0x20] sm:$0xff pattern:$0x75316420]
  %v75 = vld.sshfl [vmem:[#allocation1 + $0x28] sm:$0xff pattern:$0x75316420]
  %v76 = vld.sshfl [vmem:[#allocation1 + $0x30] sm:$0xff pattern:$0x75316420]
  %77 = vrot.lane.b32.xlu0 %v70, 127
  %v78 = vpop.permute.xlu0 %77
  %79 = vrot.lane.b32.xlu0 %v71, 127
  %v80 = vpop.permute.xlu0 %79
  %81 = vrot.lane.b32.xlu0 %v72, 127
  %v82 = vpop.permute.xlu0 %81
  %83 = vrot.lane.b32.xlu0 %v73, 127
  %v84 = vpop.permute.xlu0 %83
  %85 = vrot.lane.b32.xlu0 %v74, 127
  %v86 = vpop.permute.xlu0 %85
  %87 = vrot.lane.b32.xlu0 %v75, 127
  %v88 = vpop.permute.xlu0 %87
  %89 = vrot.lane.b32.xlu0 %v76, 127
  %v90 = vpop.permute.xlu0 %89
  %vm91 = vcmask 1039360
  %v92 = vsel %vm91, %v78, %v80
  %v93 = vsel %vm91, %v80, %v82
  %v94 = vsel %vm91, %v82, %v84
  %v95 = vsel %vm91, %v84, %v86
  %v96 = vsel %vm91, %v86, %v88
  %v97 = vsel %vm91, %v88, %v90
  %104 = vst [vmem:[#allocation3] sm:$0xf0] %v92
  %105 = vst [vmem:[#allocation3 + $0x8] sm:$0xf0] %v93
  %106 = vst [vmem:[#allocation3 + $0x10] sm:$0xf0] %v94
  %107 = vst [vmem:[#allocation3 + $0x18] sm:$0xf0] %v95
  %108 = vst [vmem:[#allocation3 + $0x20] sm:$0xf0] %v96
  %109 = vst [vmem:[#allocation3 + $0x28] sm:$0xf0] %v97
  %v110 = vld [vmem:[#allocation2] sm:$0xff]
  %v111 = vld [vmem:[#allocation2 + $0x8] sm:$0xff]
  %v112 = vld [vmem:[#allocation2 + $0x10] sm:$0xff]
  %v113 = vld [vmem:[#allocation2 + $0x18] sm:$0xf]
  %118 = vst [vmem:[#allocation1] ss:$2 sm:$0xff] %v110
  %s119 = scalar_lea.vmem [#allocation1], 16
  %120 = vst [vmem:[%s119] ss:$2 sm:$0xff] %v111
  %s121 = scalar_lea.vmem [#allocation1], 32
  %122 = vst [vmem:[%s121] ss:$2 sm:$0xff] %v112
  %s123 = scalar_lea.vmem [#allocation1], 48
  %124 = vst [vmem:[%s123] ss:$2 sm:$0xff] %v113
  %v125 = vld.sshfl [vmem:[#allocation1] sm:$0xff pattern:$0x75316420]
  %v126 = vld.sshfl [vmem:[#allocation1 + $0x8] sm:$0xff pattern:$0x75316420]
  %v127 = vld.sshfl [vmem:[#allocation1 + $0x10] sm:$0xff pattern:$0x75316420]
  %v128 = vld.sshfl [vmem:[#allocation1 + $0x18] sm:$0xff pattern:$0x75316420]
  %v129 = vld.sshfl [vmem:[#allocation1 + $0x20] sm:$0xff pattern:$0x75316420]
  %v130 = vld.sshfl [vmem:[#allocation1 + $0x28] sm:$0xff pattern:$0x75316420]
  %v131 = vld.sshfl [vmem:[#allocation1 + $0x30] sm:$0xff pattern:$0x75316420]
  %132 = vrot.lane.b32.xlu0 %v125, 126
  %v133 = vpop.permute.xlu0 %132
  %134 = vrot.lane.b32.xlu0 %v126, 126
  %v135 = vpop.permute.xlu0 %134
  %136 = vrot.lane.b32.xlu0 %v127, 126
  %v137 = vpop.permute.xlu0 %136
  %138 = vrot.lane.b32.xlu0 %v128, 126
  %v139 = vpop.permute.xlu0 %138
  %140 = vrot.lane.b32.xlu0 %v129, 126
  %v141 = vpop.permute.xlu0 %140
  %142 = vrot.lane.b32.xlu0 %v130, 126
  %v143 = vpop.permute.xlu0 %142
  %144 = vrot.lane.b32.xlu0 %v131, 126
  %v145 = vpop.permute.xlu0 %144
  %vm146 = vcmask 1031168
  %v147 = vsel %vm146, %v133, %v135
  %v148 = vsel %vm146, %v135, %v137
  %v149 = vsel %vm146, %v137, %v139
  %v150 = vsel %vm146, %v139, %v141
  %v151 = vsel %vm146, %v141, %v143
  %v152 = vsel %vm146, %v143, %v145
  %159 = vst [vmem:[#allocation3 + $0x30] sm:$0xf] %v147
  %160 = vst [vmem:[#allocation3 + $0x38] sm:$0xf] %v148
  %161 = vst [vmem:[#allocation3 + $0x40] sm:$0xf] %v149
  %162 = vst [vmem:[#allocation3 + $0x48] sm:$0xf] %v150
  %163 = vst [vmem:[#allocation3 + $0x50] sm:$0xf] %v151
  %164 = vst [vmem:[#allocation3 + $0x58] sm:$0xf] %v152
  %v165 = vld [vmem:[#allocation2] sm:$0xff]
  %v166 = vld [vmem:[#allocation2 + $0x8] sm:$0xff]
  %v167 = vld [vmem:[#allocation2 + $0x10] sm:$0xff]
  %v168 = vld [vmem:[#allocation2 + $0x18] sm:$0xf]
  %s173 = scalar_lea.vmem [#allocation1], 1
  %174 = vst [vmem:[%s173] ss:$2 sm:$0xff] %v165
  %s175 = scalar_lea.vmem [#allocation1], 17
  %176 = vst [vmem:[%s175] ss:$2 sm:$0xff] %v166
  %s177 = scalar_lea.vmem [#allocation1], 33
  %178 = vst [vmem:[%s177] ss:$2 sm:$0xff] %v167
  %s179 = scalar_lea.vmem [#allocation1], 49
  %180 = vst [vmem:[%s179] ss:$2 sm:$0xff] %v168
  %v181 = vld.sshfl [vmem:[#allocation1] sm:$0xff pattern:$0x75316420]
  %v182 = vld.sshfl [vmem:[#allocation1 + $0x8] sm:$0xff pattern:$0x75316420]
  %v183 = vld.sshfl [vmem:[#allocation1 + $0x10] sm:$0xff pattern:$0x75316420]
  %v184 = vld.sshfl [vmem:[#allocation1 + $0x18] sm:$0xff pattern:$0x75316420]
  %v185 = vld.sshfl [vmem:[#allocation1 + $0x20] sm:$0xff pattern:$0x75316420]
  %v186 = vld.sshfl [vmem:[#allocation1 + $0x28] sm:$0xff pattern:$0x75316420]
  %v187 = vld.sshfl [vmem:[#allocation1 + $0x30] sm:$0xff pattern:$0x75316420]
  %188 = vrot.lane.b32.xlu0 %v181, 110
  %v189 = vpop.permute.xlu0 %188
  %190 = vrot.lane.b32.xlu0 %v182, 110
  %v191 = vpop.permute.xlu0 %190
  %192 = vrot.lane.b32.xlu0 %v183, 110
  %v193 = vpop.permute.xlu0 %192
  %194 = vrot.lane.b32.xlu0 %v184, 110
  %v195 = vpop.permute.xlu0 %194
  %196 = vrot.lane.b32.xlu0 %v185, 110
  %v197 = vpop.permute.xlu0 %196
  %198 = vrot.lane.b32.xlu0 %v186, 110
  %v199 = vpop.permute.xlu0 %198
  %200 = vrot.lane.b32.xlu0 %v187, 110
  %v201 = vpop.permute.xlu0 %200
  %vm202 = vcmask 900096
  %v203 = vsel %vm202, %v189, %v191
  %v204 = vsel %vm202, %v191, %v193
  %v205 = vsel %vm202, %v193, %v195
  %v206 = vsel %vm202, %v195, %v197
  %v207 = vsel %vm202, %v197, %v199
  %v208 = vsel %vm202, %v199, %v201
  %215 = vst [vmem:[#allocation3 + $0x30] sm:$0xf0] %v203
  %216 = vst [vmem:[#allocation3 + $0x38] sm:$0xf0] %v204
  %217 = vst [vmem:[#allocation3 + $0x40] sm:$0xf0] %v205
  %218 = vst [vmem:[#allocation3 + $0x48] sm:$0xf0] %v206
  %219 = vst [vmem:[#allocation3 + $0x50] sm:$0xf0] %v207
  %220 = vst [vmem:[#allocation3 + $0x58] sm:$0xf0] %v208
  %v221 = vld [vmem:[#allocation2] sm:$0xff]
  %v222 = vld [vmem:[#allocation2 + $0x8] sm:$0xff]
  %v223 = vld [vmem:[#allocation2 + $0x10] sm:$0xff]
  %v224 = vld [vmem:[#allocation2 + $0x18] sm:$0xf]
  %229 = vst [vmem:[#allocation1] ss:$2 sm:$0xff] %v221
  %s230 = scalar_lea.vmem [#allocation1], 16
  %231 = vst [vmem:[%s230] ss:$2 sm:$0xff] %v222
  %s232 = scalar_lea.vmem [#allocation1], 32
  %233 = vst [vmem:[%s232] ss:$2 sm:$0xff] %v223
  %s234 = scalar_lea.vmem [#allocation1], 48
  %235 = vst [vmem:[%s234] ss:$2 sm:$0xff] %v224
  %v236 = vld.sshfl [vmem:[#allocation1] sm:$0xff pattern:$0x75316420]
  %v237 = vld.sshfl [vmem:[#allocation1 + $0x8] sm:$0xff pattern:$0x75316420]
  %v238 = vld.sshfl [vmem:[#allocation1 + $0x10] sm:$0xff pattern:$0x75316420]
  %v239 = vld.sshfl [vmem:[#allocation1 + $0x18] sm:$0xff pattern:$0x75316420]
  %v240 = vld.sshfl [vmem:[#allocation1 + $0x20] sm:$0xff pattern:$0x75316420]
  %v241 = vld.sshfl [vmem:[#allocation1 + $0x28] sm:$0xff pattern:$0x75316420]
  %v242 = vld.sshfl [vmem:[#allocation1 + $0x30] sm:$0xff pattern:$0x75316420]
  %243 = vrot.lane.b32.xlu0 %v236, 109
  %v244 = vpop.permute.xlu0 %243
  %245 = vrot.lane.b32.xlu0 %v237, 109
  %v246 = vpop.permute.xlu0 %245
  %247 = vrot.lane.b32.xlu0 %v238, 109
  %v248 = vpop.permute.xlu0 %247
  %249 = vrot.lane.b32.xlu0 %v239, 109
  %v250 = vpop.permute.xlu0 %249
  %251 = vrot.lane.b32.xlu0 %v240, 109
  %v252 = vpop.permute.xlu0 %251
  %253 = vrot.lane.b32.xlu0 %v241, 109
  %v254 = vpop.permute.xlu0 %253
  %255 = vrot.lane.b32.xlu0 %v242, 109
  %v256 = vpop.permute.xlu0 %255
  %vm257 = vcmask 891904
  %v258 = vsel %vm257, %v244, %v246
  %v259 = vsel %vm257, %v246, %v248
  %v260 = vsel %vm257, %v248, %v250
  %v261 = vsel %vm257, %v250, %v252
  %v262 = vsel %vm257, %v252, %v254
  %v263 = vsel %vm257, %v254, %v256
  %270 = vst [vmem:[#allocation3 + $0x60] sm:$0xf] %v258
  %271 = vst [vmem:[#allocation3 + $0x68] sm:$0xf] %v259
  %272 = vst [vmem:[#allocation3 + $0x70] sm:$0xf] %v260
  %273 = vst [vmem:[#allocation3 + $0x78] sm:$0xf] %v261
  %274 = vst [vmem:[#allocation3 + $0x80] sm:$0xf] %v262
  %275 = vst [vmem:[#allocation3 + $0x88] sm:$0xf] %v263
  %v276 = vld [vmem:[#allocation2] sm:$0xff]
  %v277 = vld [vmem:[#allocation2 + $0x8] sm:$0xff]
  %v278 = vld [vmem:[#allocation2 + $0x10] sm:$0xff]
  %v279 = vld [vmem:[#allocation2 + $0x18] sm:$0xf]
  %s284 = scalar_lea.vmem [#allocation1], 1
  %285 = vst [vmem:[%s284] ss:$2 sm:$0xff] %v276
  %s286 = scalar_lea.vmem [#allocation1], 17
  %287 = vst [vmem:[%s286] ss:$2 sm:$0xff] %v277
  %s288 = scalar_lea.vmem [#allocation1], 33
  %289 = vst [vmem:[%s288] ss:$2 sm:$0xff] %v278
  %s290 = scalar_lea.vmem [#allocation1], 49
  %291 = vst [vmem:[%s290] ss:$2 sm:$0xff] %v279
  %v292 = vld.sshfl [vmem:[#allocation1] sm:$0xff pattern:$0x75316420]
  %v293 = vld.sshfl [vmem:[#allocation1 + $0x8] sm:$0xff pattern:$0x75316420]
  %v294 = vld.sshfl [vmem:[#allocation1 + $0x10] sm:$0xff pattern:$0x75316420]
  %v295 = vld.sshfl [vmem:[#allocation1 + $0x18] sm:$0xff pattern:$0x75316420]
  %v296 = vld.sshfl [vmem:[#allocation1 + $0x20] sm:$0xff pattern:$0x75316420]
  %v297 = vld.sshfl [vmem:[#allocation1 + $0x28] sm:$0xff pattern:$0x75316420]
  %v298 = vld.sshfl [vmem:[#allocation1 + $0x30] sm:$0xff pattern:$0x75316420]
  %299 = vrot.lane.b32.xlu0 %v292, 108
  %v300 = vpop.permute.xlu0 %299
  %301 = vrot.lane.b32.xlu0 %v293, 108
  %v302 = vpop.permute.xlu0 %301
  %303 = vrot.lane.b32.xlu0 %v294, 108
  %v304 = vpop.permute.xlu0 %303
  %305 = vrot.lane.b32.xlu0 %v295, 108
  %v306 = vpop.permute.xlu0 %305
  %307 = vrot.lane.b32.xlu0 %v296, 108
  %v308 = vpop.permute.xlu0 %307
  %309 = vrot.lane.b32.xlu0 %v297, 108
  %v310 = vpop.permute.xlu0 %309
  %311 = vrot.lane.b32.xlu0 %v298, 108
  %v312 = vpop.permute.xlu0 %311
  %vm313 = vcmask 883712
  %v314 = vsel %vm313, %v300, %v302
  %v315 = vsel %vm313, %v302, %v304
  %v316 = vsel %vm313, %v304, %v306
  %v317 = vsel %vm313, %v306, %v308
  %v318 = vsel %vm313, %v308, %v310
  %v319 = vsel %vm313, %v310, %v312
  %326 = vst [vmem:[#allocation3 + $0x60] sm:$0xf0] %v314
  %327 = vst [vmem:[#allocation3 + $0x68] sm:$0xf0] %v315
  %328 = vst [vmem:[#allocation3 + $0x70] sm:$0xf0] %v316
  %329 = vst [vmem:[#allocation3 + $0x78] sm:$0xf0] %v317
  %330 = vst [vmem:[#allocation3 + $0x80] sm:$0xf0] %v318
  %331 = vst [vmem:[#allocation3 + $0x88] sm:$0xf0] %v319
  %v332 = vld [vmem:[#allocation2] sm:$0xff]
  %v333 = vld [vmem:[#allocation2 + $0x8] sm:$0xff]
  %v334 = vld [vmem:[#allocation2 + $0x10] sm:$0xff]
  %v335 = vld [vmem:[#allocation2 + $0x18] sm:$0xf]
  %340 = vst [vmem:[#allocation1] ss:$2 sm:$0xff] %v332
  %s341 = scalar_lea.vmem [#allocation1], 16
  %342 = vst [vmem:[%s341] ss:$2 sm:$0xff] %v333
  %s343 = scalar_lea.vmem [#allocation1], 32
  %344 = vst [vmem:[%s343] ss:$2 sm:$0xff] %v334
  %s345 = scalar_lea.vmem [#allocation1], 48
  %346 = vst [vmem:[%s345] ss:$2 sm:$0xff] %v335
  %v347 = vld.sshfl [vmem:[#allocation1] sm:$0xff pattern:$0x75316420]
  %v348 = vld.sshfl [vmem:[#allocation1 + $0x8] sm:$0xff pattern:$0x75316420]
  %v349 = vld.sshfl [vmem:[#allocation1 + $0x10] sm:$0xff pattern:$0x75316420]
  %v350 = vld.sshfl [vmem:[#allocation1 + $0x18] sm:$0xff pattern:$0x75316420]
  %v351 = vld.sshfl [vmem:[#allocation1 + $0x20] sm:$0xff pattern:$0x75316420]
  %v352 = vld.sshfl [vmem:[#allocation1 + $0x28] sm:$0xff pattern:$0x75316420]
  %v353 = vld.sshfl [vmem:[#allocation1 + $0x30] sm:$0xff pattern:$0x75316420]
  %354 = vrot.lane.b32.xlu0 %v347, 92
  %v355 = vpop.permute.xlu0 %354
  %356 = vrot.lane.b32.xlu0 %v348, 92
  %v357 = vpop.permute.xlu0 %356
  %358 = vrot.lane.b32.xlu0 %v349, 92
  %v359 = vpop.permute.xlu0 %358
  %360 = vrot.lane.b32.xlu0 %v350, 92
  %v361 = vpop.permute.xlu0 %360
  %362 = vrot.lane.b32.xlu0 %v351, 92
  %v363 = vpop.permute.xlu0 %362
  %364 = vrot.lane.b32.xlu0 %v352, 92
  %v365 = vpop.permute.xlu0 %364
  %366 = vrot.lane.b32.xlu0 %v353, 92
  %v367 = vpop.permute.xlu0 %366
  %vm368 = vcmask 752640
  %v369 = vsel %vm368, %v355, %v357
  %v370 = vsel %vm368, %v357, %v359
  %v371 = vsel %vm368, %v359, %v361
  %v372 = vsel %vm368, %v361, %v363
  %v373 = vsel %vm368, %v363, %v365
  %v374 = vsel %vm368, %v365, %v367
  %381 = vst [vmem:[#allocation3 + $0x90] sm:$0xf] %v369
  %382 = vst [vmem:[#allocation3 + $0x98] sm:$0xf] %v370
  %383 = vst [vmem:[#allocation3 + $0xa0] sm:$0xf] %v371
  %384 = vst [vmem:[#allocation3 + $0xa8] sm:$0xf] %v372
  %385 = vst [vmem:[#allocation3 + $0xb0] sm:$0xf] %v373
  %386 = vst [vmem:[#allocation3 + $0xb8] sm:$0xf] %v374
  %v387 = vld [vmem:[#allocation2] sm:$0xff]
  %v388 = vld [vmem:[#allocation2 + $0x8] sm:$0xff]
  %v389 = vld [vmem:[#allocation2 + $0x10] sm:$0xff]
  %v390 = vld [vmem:[#allocation2 + $0x18] sm:$0xf]
  %s395 = scalar_lea.vmem [#allocation1], 1
  %396 = vst [vmem:[%s395] ss:$2 sm:$0xff] %v387
  %s397 = scalar_lea.vmem [#allocation1], 17
  %398 = vst [vmem:[%s397] ss:$2 sm:$0xff] %v388
  %s399 = scalar_lea.vmem [#allocation1], 33
  %400 = vst [vmem:[%s399] ss:$2 sm:$0xff] %v389
  %s401 = scalar_lea.vmem [#allocation1], 49
  %402 = vst [vmem:[%s401] ss:$2 sm:$0xff] %v390
  %v403 = vld.sshfl [vmem:[#allocation1] sm:$0xff pattern:$0x75316420]
  %v404 = vld.sshfl [vmem:[#allocation1 + $0x8] sm:$0xff pattern:$0x75316420]
  %v405 = vld.sshfl [vmem:[#allocation1 + $0x10] sm:$0xff pattern:$0x75316420]
  %v406 = vld.sshfl [vmem:[#allocation1 + $0x18] sm:$0xff pattern:$0x75316420]
  %v407 = vld.sshfl [vmem:[#allocation1 + $0x20] sm:$0xff pattern:$0x75316420]
  %v408 = vld.sshfl [vmem:[#allocation1 + $0x28] sm:$0xff pattern:$0x75316420]
  %v409 = vld.sshfl [vmem:[#allocation1 + $0x30] sm:$0xff pattern:$0x75316420]
  %410 = vrot.lane.b32.xlu0 %v403, 91
  %v411 = vpop.permute.xlu0 %410
  %412 = vrot.lane.b32.xlu0 %v404, 91
  %v413 = vpop.permute.xlu0 %412
  %414 = vrot.lane.b32.xlu0 %v405, 91
  %v415 = vpop.permute.xlu0 %414
  %416 = vrot.lane.b32.xlu0 %v406, 91
  %v417 = vpop.permute.xlu0 %416
  %418 = vrot.lane.b32.xlu0 %v407, 91
  %v419 = vpop.permute.xlu0 %418
  %420 = vrot.lane.b32.xlu0 %v408, 91
  %v421 = vpop.permute.xlu0 %420
  %422 = vrot.lane.b32.xlu0 %v409, 91
  %v423 = vpop.permute.xlu0 %422
  %vm424 = vcmask 744448
  %v425 = vsel %vm424, %v411, %v413
  %v426 = vsel %vm424, %v413, %v415
  %v427 = vsel %vm424, %v415, %v417
  %v428 = vsel %vm424, %v417, %v419
  %v429 = vsel %vm424, %v419, %v421
  %v430 = vsel %vm424, %v421, %v423
  %437 = vst [vmem:[#allocation3 + $0x90] sm:$0xf0] %v425
  %438 = vst [vmem:[#allocation3 + $0x98] sm:$0xf0] %v426
  %439 = vst [vmem:[#allocation3 + $0xa0] sm:$0xf0] %v427
  %440 = vst [vmem:[#allocation3 + $0xa8] sm:$0xf0] %v428
  %441 = vst [vmem:[#allocation3 + $0xb0] sm:$0xf0] %v429
  %442 = vst [vmem:[#allocation3 + $0xb8] sm:$0xf0] %v430
  %v443 = vld [vmem:[#allocation2] sm:$0xff]
  %v444 = vld [vmem:[#allocation2 + $0x8] sm:$0xff]
  %v445 = vld [vmem:[#allocation2 + $0x10] sm:$0xff]
  %v446 = vld [vmem:[#allocation2 + $0x18] sm:$0xf]
  %451 = vst [vmem:[#allocation1] ss:$2 sm:$0xff] %v443
  %s452 = scalar_lea.vmem [#allocation1], 16
  %453 = vst [vmem:[%s452] ss:$2 sm:$0xff] %v444
  %s454 = scalar_lea.vmem [#allocation1], 32
  %455 = vst [vmem:[%s454] ss:$2 sm:$0xff] %v445
  %s456 = scalar_lea.vmem [#allocation1], 48
  %457 = vst [vmem:[%s456] ss:$2 sm:$0xff] %v446
  %v458 = vld.sshfl [vmem:[#allocation1] sm:$0xff pattern:$0x75316420]
  %v459 = vld.sshfl [vmem:[#allocation1 + $0x8] sm:$0xff pattern:$0x75316420]
  %v460 = vld.sshfl [vmem:[#allocation1 + $0x10] sm:$0xff pattern:$0x75316420]
  %v461 = vld.sshfl [vmem:[#allocation1 + $0x18] sm:$0xff pattern:$0x75316420]
  %v462 = vld.sshfl [vmem:[#allocation1 + $0x20] sm:$0xff pattern:$0x75316420]
  %v463 = vld.sshfl [vmem:[#allocation1 + $0x28] sm:$0xff pattern:$0x75316420]
  %v464 = vld.sshfl [vmem:[#allocation1 + $0x30] sm:$0xff pattern:$0x75316420]
  %465 = vrot.lane.b32.xlu0 %v458, 90
  %v466 = vpop.permute.xlu0 %465
  %467 = vrot.lane.b32.xlu0 %v459, 90
  %v468 = vpop.permute.xlu0 %467
  %469 = vrot.lane.b32.xlu0 %v460, 90
  %v470 = vpop.permute.xlu0 %469
  %471 = vrot.lane.b32.xlu0 %v461, 90
  %v472 = vpop.permute.xlu0 %471
  %473 = vrot.lane.b32.xlu0 %v462, 90
  %v474 = vpop.permute.xlu0 %473
  %475 = vrot.lane.b32.xlu0 %v463, 90
  %v476 = vpop.permute.xlu0 %475
  %477 = vrot.lane.b32.xlu0 %v464, 90
  %v478 = vpop.permute.xlu0 %477
  %vm479 = vcmask 736256
  %v480 = vsel %vm479, %v466, %v468
  %v481 = vsel %vm479, %v468, %v470
  %v482 = vsel %vm479, %v470, %v472
  %v483 = vsel %vm479, %v472, %v474
  %v484 = vsel %vm479, %v474, %v476
  %v485 = vsel %vm479, %v476, %v478
  %492 = vst [vmem:[#allocation3 + $0xc0] sm:$0xf] %v480
  %493 = vst [vmem:[#allocation3 + $0xc8] sm:$0xf] %v481
  %494 = vst [vmem:[#allocation3 + $0xd0] sm:$0xf] %v482
  %495 = vst [vmem:[#allocation3 + $0xd8] sm:$0xf] %v483
  %496 = vst [vmem:[#allocation3 + $0xe0] sm:$0xf] %v484
  %497 = vst [vmem:[#allocation3 + $0xe8] sm:$0xf] %v485
  %v498 = vld [vmem:[%s2] sm:$0xff]
  %v499 = vld [vmem:[#allocation3] sm:$0xff]
  %v500 = vld [vmem:[#allocation3 + $0x8] sm:$0xff]
  %v501 = vld [vmem:[#allocation3 + $0x10] sm:$0xff]
  %v502 = vld [vmem:[#allocation3 + $0x18] sm:$0xff]
  %v503 = vld [vmem:[#allocation3 + $0x20] sm:$0xff]
  %v504 = vld [vmem:[#allocation3 + $0x28] sm:$0xff]
  %v505 = vld [vmem:[#allocation3 + $0x30] sm:$0xff]
  %v506 = vld [vmem:[#allocation3 + $0x38] sm:$0xff]
  %v507 = vld [vmem:[#allocation3 + $0x40] sm:$0xff]
  %v508 = vld [vmem:[#allocation3 + $0x48] sm:$0xff]
  %v509 = vld [vmem:[#allocation3 + $0x50] sm:$0xff]
  %v510 = vld [vmem:[#allocation3 + $0x58] sm:$0xff]
  %v511 = vld [vmem:[#allocation3 + $0x60] sm:$0xff]
  %v512 = vld [vmem:[#allocation3 + $0x68] sm:$0xff]
  %v513 = vld [vmem:[#allocation3 + $0x70] sm:$0xff]
  %v514 = vld [vmem:[#allocation3 + $0x78] sm:$0xff]
  %v515 = vld [vmem:[#allocation3 + $0x80] sm:$0xff]
  %v516 = vld [vmem:[#allocation3 + $0x88] sm:$0xff]
  %v517 = vld [vmem:[#allocation3 + $0x90] sm:$0xff]
  %v518 = vld [vmem:[#allocation3 + $0x98] sm:$0xff]
  %v519 = vld [vmem:[#allocation3 + $0xa0] sm:$0xff]
  %v520 = vld [vmem:[#allocation3 + $0xa8] sm:$0xff]
  %v521 = vld [vmem:[#allocation3 + $0xb0] sm:$0xff]
  %v522 = vld [vmem:[#allocation3 + $0xb8] sm:$0xff]
  %v523 = vld [vmem:[#allocation3 + $0xc0] sm:$0xf]
  %v524 = vld [vmem:[#allocation3 + $0xc8] sm:$0xf]
  %v525 = vld [vmem:[#allocation3 + $0xd0] sm:$0xf]
  %v526 = vld [vmem:[#allocation3 + $0xd8] sm:$0xf]
  %v527 = vld [vmem:[#allocation3 + $0xe0] sm:$0xf]
  %v528 = vld [vmem:[#allocation3 + $0xe8] sm:$0xf]
  %v529 = vld [vmem:[%s3] sm:$0xff]
  %531 = vset.pattern.permute.xlu0 0
  %532 = vperm.xlu0 %531, %v529
  %v533 = vpop.permute.xlu0 %532
  %vm535 = vcmask 293888
  %v537 = vsel %vm535, %v498, 0
  %vm539 = vcmask 1043456
  %v541 = vsel %vm539, %v523, 0
  %v544 = vsel %vm539, %v524, 0
  %v547 = vsel %vm539, %v525, 0
  %v550 = vsel %vm539, %v526, 0
  %v553 = vsel %vm539, %v527, 0
  %v556 = vsel %vm539, %v528, 0
  %558 = vmatpush.msra.mxu0 0.0
  %559 = vmatpush.msra.mxu0 0.0
  %560 = vmatpush.msra.mxu0 0.0
  %561 = vmatpush.msra.mxu0 0.0
  %562 = vmatpush.msra.mxu0 0.0
  %563 = vmatpush.msra.mxu0 0.0
  %564 = vmatpush.msra.mxu0 0.0
  %565 = vmatpush.msra.mxu0 0.0
  %566 = vmatpush.msra.mxu0 0.0
  %567 = vmatpush.msra.mxu0 0.0
  %568 = vmatpush.msra.mxu0 0.0
  %569 = vmatpush.msra.mxu0 %v541
  %570 = vmatpush.msra.mxu0 %v517
  %571 = vmatpush.msra.mxu0 %v511
  %572 = vmatpush.msra.mxu0 %v505
  %573 = vmatpush.msra.mxu0 %v499
  %574 = vmatmul.f32.gmra.mxu0 %v537
  %v575 = vpop.f32.mrf.mxu0
  %v576 = vadd.f32 %v533, %v575
  %577 = vdwg.mxu0
  %578 = vmatpush.msra.mxu0 0.0
  %579 = vmatpush.msra.mxu0 0.0
  %580 = vmatpush.msra.mxu0 0.0
  %581 = vmatpush.msra.mxu0 0.0
  %582 = vmatpush.msra.mxu0 0.0
  %583 = vmatpush.msra.mxu0 0.0
  %584 = vmatpush.msra.mxu0 0.0
  %585 = vmatpush.msra.mxu0 0.0
  %586 = vmatpush.msra.mxu0 0.0
  %587 = vmatpush.msra.mxu0 0.0
  %588 = vmatpush.msra.mxu0 0.0
  %589 = vmatpush.msra.mxu0 %v544
  %590 = vmatpush.msra.mxu0 %v518
  %591 = vmatpush.msra.mxu0 %v512
  %592 = vmatpush.msra.mxu0 %v506
  %593 = vmatpush.msra.mxu0 %v500
  %594 = vmatmul.f32.gmra.mxu0 %v537
  %v595 = vpop.f32.mrf.mxu0
  %v596 = vadd.f32 %v533, %v595
  %597 = vdwg.mxu0
  %598 = vmatpush.msra.mxu0 0.0
  %599 = vmatpush.msra.mxu0 0.0
  %600 = vmatpush.msra.mxu0 0.0
  %601 = vmatpush.msra.mxu0 0.0
  %602 = vmatpush.msra.mxu0 0.0
  %603 = vmatpush.msra.mxu0 0.0
  %604 = vmatpush.msra.mxu0 0.0
  %605 = vmatpush.msra.mxu0 0.0
  %606 = vmatpush.msra.mxu0 0.0
  %607 = vmatpush.msra.mxu0 0.0
  %608 = vmatpush.msra.mxu0 0.0
  %609 = vmatpush.msra.mxu0 %v547
  %610 = vmatpush.msra.mxu0 %v519
  %611 = vmatpush.msra.mxu0 %v513
  %612 = vmatpush.msra.mxu0 %v507
  %613 = vmatpush.msra.mxu0 %v501
  %614 = vmatmul.f32.gmra.mxu0 %v537
  %v615 = vpop.f32.mrf.mxu0
  %v616 = vadd.f32 %v533, %v615
  %617 = vdwg.mxu0
  %618 = vmatpush.msra.mxu0 0.0
  %619 = vmatpush.msra.mxu0 0.0
  %620 = vmatpush.msra.mxu0 0.0
  %621 = vmatpush.msra.mxu0 0.0
  %622 = vmatpush.msra.mxu0 0.0
  %623 = vmatpush.msra.mxu0 0.0
  %624 = vmatpush.msra.mxu0 0.0
  %625 = vmatpush.msra.mxu0 0.0
  %626 = vmatpush.msra.mxu0 0.0
  %627 = vmatpush.msra.mxu0 0.0
  %628 = vmatpush.msra.mxu0 0.0
  %629 = vmatpush.msra.mxu0 %v550
  %630 = vmatpush.msra.mxu0 %v520
  %631 = vmatpush.msra.mxu0 %v514
  %632 = vmatpush.msra.mxu0 %v508
  %633 = vmatpush.msra.mxu0 %v502
  %634 = vmatmul.f32.gmra.mxu0 %v537
  %v635 = vpop.f32.mrf.mxu0
  %v636 = vadd.f32 %v533, %v635
  %637 = vdwg.mxu0
  %638 = vmatpush.msra.mxu0 0.0
  %639 = vmatpush.msra.mxu0 0.0
  %640 = vmatpush.msra.mxu0 0.0
  %641 = vmatpush.msra.mxu0 0.0
  %642 = vmatpush.msra.mxu0 0.0
  %643 = vmatpush.msra.mxu0 0.0
  %644 = vmatpush.msra.mxu0 0.0
  %645 = vmatpush.msra.mxu0 0.0
  %646 = vmatpush.msra.mxu0 0.0
  %647 = vmatpush.msra.mxu0 0.0
  %648 = vmatpush.msra.mxu0 0.0
  %649 = vmatpush.msra.mxu0 %v553
  %650 = vmatpush.msra.mxu0 %v521
  %651 = vmatpush.msra.mxu0 %v515
  %652 = vmatpush.msra.mxu0 %v509
  %653 = vmatpush.msra.mxu0 %v503
  %654 = vmatmul.f32.gmra.mxu0 %v537
  %v655 = vpop.f32.mrf.mxu0
  %v656 = vadd.f32 %v533, %v655
  %657 = vdwg.mxu0
  %658 = vmatpush.msra.mxu0 0.0
  %659 = vmatpush.msra.mxu0 0.0
  %660 = vmatpush.msra.mxu0 0.0
  %661 = vmatpush.msra.mxu0 0.0
  %662 = vmatpush.msra.mxu0 0.0
  %663 = vmatpush.msra.mxu0 0.0
  %664 = vmatpush.msra.mxu0 0.0
  %665 = vmatpush.msra.mxu0 0.0
  %666 = vmatpush.msra.mxu0 0.0
  %667 = vmatpush.msra.mxu0 0.0
  %668 = vmatpush.msra.mxu0 0.0
  %669 = vmatpush.msra.mxu0 %v556
  %670 = vmatpush.msra.mxu0 %v522
  %671 = vmatpush.msra.mxu0 %v516
  %672 = vmatpush.msra.mxu0 %v510
  %673 = vmatpush.msra.mxu0 %v504
  %674 = vmatmul.f32.gmra.mxu0 %v537
  %v675 = vpop.f32.mrf.mxu0
  %v676 = vadd.f32 %v533, %v675
  %677 = vdwg.mxu0
  %678 = vst [vmem:[%s4] sm:$0xff] %v576
  %679 = vst [vmem:[%s4 + $0x8] sm:$0xff] %v596
  %680 = vst [vmem:[%s4 + $0x10] sm:$0xff] %v616
  %681 = vst [vmem:[%s4 + $0x18] sm:$0xff] %v636
  %682 = vst [vmem:[%s4 + $0x20] sm:$0xff] %v656
  %683 = vst [vmem:[%s4 + $0x28] sm:$0xff] %v676
  // Predicated region
  $region18: #{conv2d_actnorm_forward.1} parent=0 // pred_check
    _
  $region19: #{conv2d_actnorm_forward.1} parent=0 // pred_check_branch
    %685 = sbr.rel (0) target = $region21
  $region20: #{conv2d_actnorm_forward.1} parent=0 // pred_region
    _
  $region21: #{conv2d_actnorm_forward.1} parent=0 // pred_fallthru
    _
  // Predicated region
  $region22: #{conv2d_actnorm_forward.1} parent=0 // pred_check
    _
  $region23: #{conv2d_actnorm_forward.1} parent=0 // pred_check_branch
    %687 = sbr.rel (0) target = $region25
  $region24: #{conv2d_actnorm_forward.1} parent=0 // pred_region
    _
  $region25: #{conv2d_actnorm_forward.1} parent=0 // pred_fallthru
    _

</llo_original>
